<compile_context>
chip_gen: v7x
topology: tpu7x:2x2x1
jax: 0.10.0
libtpu: 0.0.40
codegen_flags: <defaults>
</compile_context>

<pallas_src>
import jax
import jax.numpy as jnp
from jax.experimental import pallas as pl
from jax.experimental.pallas import tpu as pltpu


def _qwen2_mlp_kernel(x_ref, wgu_ref, wd_ref, o_ref, acc_ref):
    # Grid = (token tiles, intermediate chunks); reduction axis (k) is last.
    k = pl.program_id(1)

    @pl.when(k == 0)
    def _():
        acc_ref[...] = jnp.zeros_like(acc_ref)

    x = x_ref[...]

    # Merged gate/up projection: one DMA'd (H, 2*ti) weight block, one matmul.
    gate_up = jnp.dot(x, wgu_ref[...], preferred_element_type=jnp.float32)
    ti = wgu_ref.shape[1] // 2
    gate = gate_up[:, :ti]   # ti is a multiple of 128 (or full) -> lane-aligned slice
    up = gate_up[:, ti:]

    # SiluAndMul: silu(gate) * up  (exp rides the EUP slot; kernel is MXU/HBM bound)
    h = (gate * jax.nn.sigmoid(gate)) * up

    # RowParallelLinear (down projection), accumulated over intermediate chunks.
    acc_ref[...] += jnp.dot(
        h.astype(wd_ref.dtype), wd_ref[...], preferred_element_type=jnp.float32
    )

    @pl.when(k == pl.num_programs(1) - 1)
    def _():
        o_ref[...] = acc_ref[...].astype(o_ref.dtype)


def _round_up(a, b):
    return pl.cdiv(a, b) * b


def qwen2_mlp(x, w_gate, w_up, w_down, *, tm=256, ti=512):
    """Fused Qwen2 MLP.

    x:       [T, H]
    w_gate:  [H, I]   (gate_proj, stored [in, out])
    w_up:    [H, I]   (up_proj,   stored [in, out])
    w_down:  [I, H]   (down_proj, stored [in, out])
    returns: [T, H] in x.dtype
    """
    T, H = x.shape
    I = w_gate.shape[1]
    assert w_gate.shape == (H, I) and w_up.shape == (H, I)
    assert w_down.shape == (I, H)
    assert tm % 8 == 0, "tm must be a multiple of 8 (sublane)"

    # ---- intermediate-dim tiling -------------------------------------------
    ti = min(ti, I)
    assert I % ti == 0, "intermediate_size must be divisible by the ti tile size"
    n_k = I // ti

    # ---- token tiling (pad T up to a multiple of the token tile) -----------
    tm_eff = min(tm, _round_up(T, 8))
    t_pad = _round_up(T, tm_eff)
    x_in = jnp.pad(x, ((0, t_pad - T), (0, 0))) if t_pad != T else x
    n_m = t_pad // tm_eff

    # ---- merge gate/up weights, chunk-interleaved along the output dim -----
    # Block k of width 2*ti holds [gate chunk k | up chunk k], so one (H, 2*ti)
    # DMA per grid step feeds both projections. (One-time weight preprocessing
    # in a real deployment; gate_up_proj is already a single merged weight.)
    wgu = jnp.concatenate(
        [w_gate.reshape(H, n_k, ti), w_up.reshape(H, n_k, ti)], axis=2
    ).reshape(H, 2 * I)

    # ---- cost estimate (advisory, for XLA scheduling around the kernel) ----
    itemsize = jnp.dtype(x.dtype).itemsize
    flops = 2 * t_pad * H * (2 * I) + 2 * t_pad * I * H
    bytes_accessed = (
        t_pad * H * itemsize                                 # x in
        + wgu.size * jnp.dtype(wgu.dtype).itemsize           # gate+up weights
        + w_down.size * jnp.dtype(w_down.dtype).itemsize     # down weights
        + t_pad * H * itemsize                               # out
    )
    cost = pl.CostEstimate(
        flops=flops, transcendentals=t_pad * I, bytes_accessed=bytes_accessed
    )

    out = pl.pallas_call(
        _qwen2_mlp_kernel,
        out_shape=jax.ShapeDtypeStruct((t_pad, H), x.dtype),
        grid_spec=pltpu.PrefetchScalarGridSpec(
            num_scalar_prefetch=0,
            grid=(n_m, n_k),
            in_specs=[
                pl.BlockSpec((tm_eff, H), lambda i, k: (i, 0)),   # x token tile
                pl.BlockSpec((H, 2 * ti), lambda i, k: (0, k)),   # merged gate|up chunk
                pl.BlockSpec((ti, H), lambda i, k: (k, 0)),       # down-proj chunk
            ],
            out_specs=pl.BlockSpec((tm_eff, H), lambda i, k: (i, 0)),
            scratch_shapes=[pltpu.VMEM((tm_eff, H), jnp.float32)],  # f32 accumulator
        ),
        compiler_params=pltpu.CompilerParams(
            # Token tiles independent (megacore-parallel); intermediate dim is a
            # reduction -> arbitrary, kept as the last grid axis.
            dimension_semantics=("parallel", "arbitrary"),
            vmem_limit_bytes=64 * 1024 * 1024,
        ),
        cost_estimate=cost,
    )(x_in, wgu, w_down)

    return out[:T] if t_pad != T else out


def qwen2_mlp_ref(x, w_gate, w_up, w_down):
    gate = x @ w_gate
    up = x @ w_up
    h = jax.nn.silu(gate) * up
    return h @ w_down


if __name__ == "__main__":
    # Small, Qwen2-like synthetic config (hidden=32, intermediate=256, seq=16).
    T = 16
    H = 32
    I = 256

    key = jax.random.PRNGKey(0)
    kx, kg, ku, kd = jax.random.split(key, 4)
    x = jax.random.normal(kx, (T, H), dtype=jnp.float32)
    w_gate = jax.random.normal(kg, (H, I), dtype=jnp.float32) * 0.05
    w_up = jax.random.normal(ku, (H, I), dtype=jnp.float32) * 0.05
    w_down = jax.random.normal(kd, (I, H), dtype=jnp.float32) * 0.05

    ref = qwen2_mlp_ref(x, w_gate, w_up, w_down)

    # f32 path with small tiles so BOTH grid axes are exercised
    # (2 token tiles x 2 intermediate chunks).
    out = qwen2_mlp(x, w_gate, w_up, w_down, tm=8, ti=128)
    out = jax.block_until_ready(out)
    assert out.shape == (T, H) and out.dtype == x.dtype
    assert jnp.allclose(out, ref, atol=1e-4, rtol=1e-4), (
        f"f32 max abs err {jnp.max(jnp.abs(out - ref))}"
    )

    # bf16 deployment path (weights/activations bf16, f32 accumulation in-kernel),
    # default tile sizes (auto-clamped to the tiny test shapes).
    out_bf16 = qwen2_mlp(
        x.astype(jnp.bfloat16),
        w_gate.astype(jnp.bfloat16),
        w_up.astype(jnp.bfloat16),
        w_down.astype(jnp.bfloat16),
    )
    out_bf16 = jax.block_until_ready(out_bf16)
    assert out_bf16.shape == (T, H) and out_bf16.dtype == jnp.bfloat16
    assert jnp.allclose(out_bf16.astype(jnp.float32), ref, atol=5e-2, rtol=5e-2), (
        f"bf16 max abs err {jnp.max(jnp.abs(out_bf16.astype(jnp.float32) - ref))}"
    )

    print("KERNEL_OK")
</pallas_src>

<mosaic_0001>
module attributes {stable_mosaic.version = 11 : i64} {
  func.func @_qwen2_mlp_kernel(%arg0: i32, %arg1: i32, %arg2: memref<8x32xf32, #tpu.memory_space<vmem>>, %arg3: memref<32x256xf32, #tpu.memory_space<vmem>>, %arg4: memref<128x32xf32, #tpu.memory_space<vmem>>, %arg5: memref<8x32xf32, #tpu.memory_space<vmem>>, %arg6: memref<8x32xf32, #tpu.memory_space<vmem>>) attributes {dimension_semantics = [#tpu.dimension_semantics<parallel>, #tpu.dimension_semantics<arbitrary>], iteration_bounds = array<i64: 2, 2>, scalar_prefetch = 0 : i64, scratch_operands = 1 : i64, tpu.core_type = #tpu.core_type<tc>, window_params = [{transform_indices = @transform_0, window_bounds = array<i64: 8, 32>}, {transform_indices = @transform_1, window_bounds = array<i64: 32, 256>}, {transform_indices = @transform_2, window_bounds = array<i64: 128, 32>}, {transform_indices = @transform_3, window_bounds = array<i64: 8, 32>}]} {
    %c0_i32 = arith.constant 0 : i32
    %0 = arith.cmpi eq, %arg1, %c0_i32 : i32
    %1 = arith.extui %0 : i1 to i32
    %c0_i32_0 = arith.constant 0 : i32
    %2 = arith.cmpi ne, %1, %c0_i32_0 : i32
    scf.if %2 {
      %cst_13 = arith.constant 0.000000e+00 : f32
      %23 = vector.broadcast %cst_13 : f32 to vector<8x32xf32>
      %c0_14 = arith.constant 0 : index
      %c0_15 = arith.constant 0 : index
      %24 = vector.load %arg6[%c0_14, %c0_15] : memref<8x32xf32, #tpu.memory_space<vmem>>, vector<8x32xf32>
      tpu.vector_store %arg6[%c0_14, %c0_15], %23 {strides = array<i32>} : memref<8x32xf32, #tpu.memory_space<vmem>>, vector<8x32xf32>,
    } else {
    }
    %c0 = arith.constant 0 : index
    %c0_1 = arith.constant 0 : index
    %3 = vector.load %arg2[%c0, %c0_1] : memref<8x32xf32, #tpu.memory_space<vmem>>, vector<8x32xf32>
    %c0_2 = arith.constant 0 : index
    %c0_3 = arith.constant 0 : index
    %4 = vector.load %arg3[%c0_2, %c0_3] : memref<32x256xf32, #tpu.memory_space<vmem>>, vector<32x256xf32>
    %cst = arith.constant dense<0.000000e+00> : vector<8x256xf32>
    %5 = tpu.matmul %3, %4, %cst {dimension_numbers = #tpu.dot_dimension_numbers<[1], [0], [0], [1], [0, 0, 1, 1], [], []>} : vector<8x32xf32>, vector<32x256xf32>, vector<8x256xf32> -> vector<8x256xf32>
    %6 = vector.extract_strided_slice %5 {offsets = [0, 0], sizes = [8, 128], strides = [1, 1]} : vector<8x256xf32> to vector<8x128xf32>
    %7 = vector.extract_strided_slice %5 {offsets = [0, 128], sizes = [8, 128], strides = [1, 1]} : vector<8x256xf32> to vector<8x128xf32>
    %8 = arith.negf %6 : vector<8x128xf32>
    %9 = math.exp %8 : vector<8x128xf32>
    %cst_4 = arith.constant 1.000000e+00 : f32
    %10 = vector.broadcast %cst_4 : f32 to vector<8x128xf32>
    %11 = arith.addf %10, %9 : vector<8x128xf32>
    %12 = arith.divf %10, %11 : vector<8x128xf32>
    %13 = arith.mulf %6, %12 : vector<8x128xf32>
    %14 = arith.mulf %13, %7 : vector<8x128xf32>
    %c0_5 = arith.constant 0 : index
    %c0_6 = arith.constant 0 : index
    %15 = vector.load %arg6[%c0_5, %c0_6] : memref<8x32xf32, #tpu.memory_space<vmem>>, vector<8x32xf32>
    %c0_7 = arith.constant 0 : index
    %c0_8 = arith.constant 0 : index
    %16 = vector.load %arg4[%c0_7, %c0_8] : memref<128x32xf32, #tpu.memory_space<vmem>>, vector<128x32xf32>
    %cst_9 = arith.constant dense<0.000000e+00> : vector<8x32xf32>
    %17 = tpu.matmul %14, %16, %cst_9 {dimension_numbers = #tpu.dot_dimension_numbers<[1], [0], [0], [1], [0, 0, 1, 1], [], []>} : vector<8x128xf32>, vector<128x32xf32>, vector<8x32xf32> -> vector<8x32xf32>
    %18 = arith.addf %15, %17 : vector<8x32xf32>
    %c0_10 = arith.constant 0 : index
    %c0_11 = arith.constant 0 : index
    %19 = vector.load %arg6[%c0_10, %c0_11] : memref<8x32xf32, #tpu.memory_space<vmem>>, vector<8x32xf32>
    tpu.vector_store %arg6[%c0_10, %c0_11], %18 {strides = array<i32>} : memref<8x32xf32, #tpu.memory_space<vmem>>, vector<8x32xf32>,
    %c1_i32 = arith.constant 1 : i32
    %20 = arith.cmpi eq, %arg1, %c1_i32 : i32
    %21 = arith.extui %20 : i1 to i32
    %c0_i32_12 = arith.constant 0 : i32
    %22 = arith.cmpi ne, %21, %c0_i32_12 : i32
    scf.if %22 {
      %c0_13 = arith.constant 0 : index
      %c0_14 = arith.constant 0 : index
      %23 = vector.load %arg6[%c0_13, %c0_14] : memref<8x32xf32, #tpu.memory_space<vmem>>, vector<8x32xf32>
      %c0_15 = arith.constant 0 : index
      %c0_16 = arith.constant 0 : index
      %24 = vector.load %arg5[%c0_15, %c0_16] : memref<8x32xf32, #tpu.memory_space<vmem>>, vector<8x32xf32>
      tpu.vector_store %arg5[%c0_15, %c0_16], %23 {strides = array<i32>} : memref<8x32xf32, #tpu.memory_space<vmem>>, vector<8x32xf32>,
    } else {
    }
    return
  }
  func.func @transform_0(%arg0: i32, %arg1: i32) -> (i32, i32) {
    %c0_i32 = arith.constant 0 : i32
    %c0_i32_0 = arith.constant 0 : i32
    return %arg0, %c0_i32 : i32, i32
  }
  func.func @transform_1(%arg0: i32, %arg1: i32) -> (i32, i32) {
    %c0_i32 = arith.constant 0 : i32
    %c0_i32_0 = arith.constant 0 : i32
    return %c0_i32, %arg1 : i32, i32
  }
  func.func @transform_2(%arg0: i32, %arg1: i32) -> (i32, i32) {
    %c0_i32 = arith.constant 0 : i32
    %c0_i32_0 = arith.constant 0 : i32
    return %arg1, %c0_i32 : i32, i32
  }
  func.func @transform_3(%arg0: i32, %arg1: i32) -> (i32, i32) {
    %c0_i32 = arith.constant 0 : i32
    %c0_i32_0 = arith.constant 0 : i32
    return %arg0, %c0_i32 : i32, i32
  }
}

</mosaic_0001>

<llo_original>
// kernel: tpu_custom_call.1
$region0: #{tpu_custom_call.1}
  #allocation0 [shape = 'u32[]', space=smem, size = 0x4, offset = 0x4, fixed_abs, tag = 'smem constant byte address 0x4 - core index']
  #allocation1 [shape = 'u32[144,128]{1,0:T(1,128)}', space=vmem, size = 0x12000, scoped, tag = 'internal scratch']
  #allocation2 [shape = 'f32[8,32]{1,0:T(8,128)}', space=vmem, size = 0x1000, scoped, tag = 'scratch operand']
  %s0 = inlined_call_operand.hbm [shape: f32[16,32], index: 0, kind: input, shape index: {}]
  %s1 = inlined_call_operand.hbm [shape: f32[32,512], index: 1, kind: input, shape index: {}]
  %s2 = inlined_call_operand.hbm [shape: f32[256,32], index: 2, kind: input, shape index: {}]
  %s3 = inlined_call_operand.hbm [shape: f32[16,32], index: 3, kind: output, shape index: {}]
  %s4 = sld [smem:[#allocation0]]
  $region65: #{tpu_custom_call.1} parent=0
    _
  %s6 = ssub.s32 1, %s4
  %s7 = scalar_select 0, %s6, %s4
  $region1: #{tpu_custom_call.1} parent=0
    #allocation3 [shape = 'u8[8192]{0}', space=vmem, size = 0x2000, scoped, tag = 'input window, operand 0']
    #allocation4 [shape = 's32[2]{0}', space=sflag, size = 0x8, scoped, tag = 'scoped memory for tpu_custom_call.1']
    #allocation5 [shape = 's32[2]{0}', space=sflag, size = 0x8, scoped, tag = 'scoped memory for tpu_custom_call.1']
    #allocation6 [shape = 'u8[65536]{0}', space=vmem, size = 0x10000, scoped, tag = 'input window, operand 1']
    #allocation7 [shape = 's32[2]{0}', space=sflag, size = 0x8, scoped, tag = 'scoped memory for tpu_custom_call.1']
    #allocation8 [shape = 'u8[131072]{0}', space=vmem, size = 0x20000, scoped, tag = 'input window, operand 2']
    #allocation9 [shape = 'u8[8192]{0}', space=vmem, size = 0x2000, scoped, tag = 'output window, operand 0']
    %8 = vsyncpa [#allocation4], 0
    %s9 = scalar_lea.sflag [#allocation4], 1
    %10 = vsyncpa %s9, 0
    %11 = vsyncpa [#allocation7], 0
    %s12 = scalar_lea.sflag [#allocation7], 1
    %13 = vsyncpa %s12, 0
    %14 = vsyncpa [#allocation5], 0
    %s15 = scalar_lea.sflag [#allocation5], 1
    %16 = vsyncpa %s15, 0
    loop: start=0, step=1, limit=6
    $region2: #{tpu_custom_call.1} parent=1 // loop_pre_header
      _
    $region3: #{tpu_custom_call.1} parent=1 // loop_header
      %s18 = sphi 0, %s22
      %p19 = scmp.ge.s32.totalorder %s18, 6
      %s25 = sphi 0, %s37
      %s26 = sphi 0, %s33
      %s27 = sphi 0, %s25
      %s28 = sphi 0, %s26
      %s29 = sphi 0, %s27
      %s30 = sphi 0, %s28
      %s40 = sphi 0, %s42
      %s43 = sphi 0, %s40
      %s44 = sphi 0, %s43
      %s60 = sphi 0, %s44
      %s66 = sphi 0, %s68
      %s69 = sphi 0, %s66
      %s70 = sphi 0, %s69
      %s86 = sphi 0, %s70
      %s92 = sphi 0, %s94
      %s95 = sphi 0, %s92
      %s96 = sphi 0, %s95
      %s112 = sphi 0, %s96
      %s118 = sphi 0, %s120
      %s121 = sphi 0, %s118
      %s122 = sphi 0, %s121
      %s138 = sphi 0, %s122
    $region4: #{tpu_custom_call.1} parent=1 // loop_header_branch
      %21 = sbr.rel (%p19) target = $region8
    $region5: #{tpu_custom_call.1} parent=1 // loop_body
      %s23 = ssub.s32 %s18, 1
      %s24 = ssub.s32 %s18, 2
      %s31 = sadd.s32 1, %s26
      %p32 = scmp.ge.s32.totalorder %s31, 2
      %s33 = scalar_select %p32, 0, %s31
      %s34 = sadd.s32 1, %s25
      %s35 = scalar_select %p32, %s34, %s25
      %p36 = scmp.ge.s32.totalorder %s35, 2
      %s37 = scalar_select %p36, 0, %s35
      %s38 = ssub.s32 %s25, %s37
      %p39 = scmp.eq.s32.totalorder %s38, 0
      %s41 = sadd.s32 %s40, 1
      %s42 = scalar_select %p39, %s40, %s41
      %p45 = pneg %p39
      %p46 = scmp.eq.s32.totalorder %s18, 3
      %p47 = por %p45, %p46
      %p48 = scmp.ne.s32.totalorder %s40, %s43
      %p49 = scmp.eq.s32.totalorder %s18, 0
      %p50 = por %p48, %p49
      %p51 = scmp.ne.s32.totalorder %s40, %s43
      %p52 = scmp.eq.s32.totalorder %s23, 3
      %p53 = por %p51, %p52
      %p54 = scmp.ne.s32.totalorder %s43, %s44
      %p55 = scmp.eq.s32.totalorder %s23, 0
      %p56 = por %p54, %p55
      %p57 = scmp.ne.s32.totalorder %s43, %s44
      %p58 = scmp.eq.s32.totalorder %s24, 3
      %p59 = por %p57, %p58
      %p61 = scmp.ne.s32.totalorder %s44, %s60
      %p62 = scmp.eq.s32.totalorder %s24, 0
      %p63 = por %p61, %p62
      %s64 = ssub.s32 %s26, %s33
      %p65 = scmp.eq.s32.totalorder %s64, 0
      %s67 = sadd.s32 %s66, 1
      %s68 = scalar_select %p65, %s66, %s67
      %p71 = pneg %p65
      %p72 = scmp.eq.s32.totalorder %s18, 3
      %p73 = por %p71, %p72
      %p74 = scmp.ne.s32.totalorder %s66, %s69
      %p75 = scmp.eq.s32.totalorder %s18, 0
      %p76 = por %p74, %p75
      %p77 = scmp.ne.s32.totalorder %s66, %s69
      %p78 = scmp.eq.s32.totalorder %s23, 3
      %p79 = por %p77, %p78
      %p80 = scmp.ne.s32.totalorder %s69, %s70
      %p81 = scmp.eq.s32.totalorder %s23, 0
      %p82 = por %p80, %p81
      %p83 = scmp.ne.s32.totalorder %s69, %s70
      %p84 = scmp.eq.s32.totalorder %s24, 3
      %p85 = por %p83, %p84
      %p87 = scmp.ne.s32.totalorder %s70, %s86
      %p88 = scmp.eq.s32.totalorder %s24, 0
      %p89 = por %p87, %p88
      %s90 = ssub.s32 %s26, %s33
      %p91 = scmp.eq.s32.totalorder %s90, 0
      %s93 = sadd.s32 %s92, 1
      %s94 = scalar_select %p91, %s92, %s93
      %p97 = pneg %p91
      %p98 = scmp.eq.s32.totalorder %s18, 3
      %p99 = por %p97, %p98
      %p100 = scmp.ne.s32.totalorder %s92, %s95
      %p101 = scmp.eq.s32.totalorder %s18, 0
      %p102 = por %p100, %p101
      %p103 = scmp.ne.s32.totalorder %s92, %s95
      %p104 = scmp.eq.s32.totalorder %s23, 3
      %p105 = por %p103, %p104
      %p106 = scmp.ne.s32.totalorder %s95, %s96
      %p107 = scmp.eq.s32.totalorder %s23, 0
      %p108 = por %p106, %p107
      %p109 = scmp.ne.s32.totalorder %s95, %s96
      %p110 = scmp.eq.s32.totalorder %s24, 3
      %p111 = por %p109, %p110
      %p113 = scmp.ne.s32.totalorder %s96, %s112
      %p114 = scmp.eq.s32.totalorder %s24, 0
      %p115 = por %p113, %p114
      %s116 = ssub.s32 %s25, %s37
      %p117 = scmp.eq.s32.totalorder %s116, 0
      %s119 = sadd.s32 %s118, 1
      %s120 = scalar_select %p117, %s118, %s119
      %p123 = pneg %p117
      %p124 = scmp.eq.s32.totalorder %s18, 3
      %p125 = por %p123, %p124
      %p126 = scmp.ne.s32.totalorder %s118, %s121
      %p127 = scmp.eq.s32.totalorder %s18, 0
      %p128 = por %p126, %p127
      %p129 = scmp.ne.s32.totalorder %s118, %s121
      %p130 = scmp.eq.s32.totalorder %s23, 3
      %p131 = por %p129, %p130
      %p132 = scmp.ne.s32.totalorder %s121, %s122
      %p133 = scmp.eq.s32.totalorder %s23, 0
      %p134 = por %p132, %p133
      %p135 = scmp.ne.s32.totalorder %s121, %s122
      %p136 = scmp.eq.s32.totalorder %s24, 3
      %p137 = por %p135, %p136
      %p139 = scmp.ne.s32.totalorder %s122, %s138
      %p140 = scmp.eq.s32.totalorder %s24, 0
      %p141 = por %p139, %p140
      %p142 = scmp.le.s32.totalorder 1, %s18
      %p143 = scmp.lt.s32.totalorder %s18, 5
      %p144 = pnand %p142, %p143
      %p145 = pneg %p144
      // Predicated region
      $region9: #{tpu_custom_call.1} parent=5 // pred_check
        _
      $region10: #{tpu_custom_call.1} parent=5 // pred_check_branch
        %147 = sbr.rel (%p144) target = $region12
      $region11: #{tpu_custom_call.1} parent=5 // pred_region
        %s148 = ssub.s32 %s18, 1
      $region12: #{tpu_custom_call.1} parent=5 // pred_fallthru
        _
      %p149 = scmp.lt.s32.totalorder %s18, 4
      // Predicated region
      $region13: #{tpu_custom_call.1} parent=5 // pred_check
        %p150 = pneg %p149
      $region14: #{tpu_custom_call.1} parent=5 // pred_check_branch
        %152 = sbr.rel (%p150) target = $region16
      $region15: #{tpu_custom_call.1} parent=5 // pred_region
        // Predicated region
        $region17: #{tpu_custom_call.1} parent=15 // pred_check
          %p153 = pneg %p50
        $region18: #{tpu_custom_call.1} parent=15 // pred_check_branch
          %155 = sbr.rel (%p153) target = $region20
        $region19: #{tpu_custom_call.1} parent=15 // pred_region
          %s156 = sand.u32 %s40, 1
          %s157 = scalar_lea.sflag [#allocation4], %s156
          %s158 = sand.u32 %s40, 1
          %s159 = smul.addr %s158, 8
          %s160 = scalar_lea.vmem [#allocation3], %s159
          %s162 = ssub.s32 128, 128
          %163 = vsyncadd %s157, %s162
          %s164 = smul.addr %s25, 128
          %s165 = scalar_lea.hbm %s0, %s164
          %s167 = sshll.u32 %s160, 4
          %s168 = int_to_ptr.vmem [resolvable:$true] %s167
          %170 = dma.hbm_to_vmem [thread:$0]  %s165, 128, %s168, %s157
        $region20: #{tpu_custom_call.1} parent=15 // pred_fallthru
          _
        // Predicated region
        $region21: #{tpu_custom_call.1} parent=15 // pred_check
          %p171 = pneg %p76
        $region22: #{tpu_custom_call.1} parent=15 // pred_check_branch
          %173 = sbr.rel (%p171) target = $region24
        $region23: #{tpu_custom_call.1} parent=15 // pred_region
          %s174 = sand.u32 %s18, 1
          %s175 = scalar_lea.sflag [#allocation7], %s174
          %s176 = sand.u32 %s66, 1
          %s177 = smul.addr %s176, 64
          %s178 = scalar_lea.vmem [#allocation6], %s177
          %s179 = smul.u32 2, %s26
          %s181 = ssub.s32 1024, 1024
          %182 = vsyncadd %s175, %s181
          %s183 = smul.addr %s179, 128
          %s184 = scalar_lea.hbm %s1, %s183
          %s185 = sshll.u32 %s178, 4
          %s186 = int_to_ptr.vmem [resolvable:$true] %s185
          %191 = dma.hbm_to_vmem [thread:$0]  %s184, 1024, %s186, %s175, 512, 256, 16
        $region24: #{tpu_custom_call.1} parent=15 // pred_fallthru
          _
        // Predicated region
        $region25: #{tpu_custom_call.1} parent=15 // pred_check
          %p192 = pneg %p102
        $region26: #{tpu_custom_call.1} parent=15 // pred_check_branch
          %194 = sbr.rel (%p192) target = $region28
        $region27: #{tpu_custom_call.1} parent=15 // pred_region
          %s195 = sand.u32 %s18, 1
          %s196 = scalar_lea.sflag [#allocation7], %s195
          %s197 = sand.u32 %s92, 1
          %s198 = smul.addr %s197, 128
          %s199 = scalar_lea.vmem [#allocation8], %s198
          %s200 = smul.u32 16, %s26
          %s202 = ssub.s32 2048, 2048
          %203 = vsyncadd %s196, %s202
          %s204 = smul.addr %s200, 128
          %s205 = scalar_lea.hbm %s2, %s204
          %s206 = sshll.u32 %s199, 4
          %s207 = int_to_ptr.vmem [resolvable:$true] %s206
          %212 = dma.hbm_to_vmem [thread:$0]  %s205, 2048, %s207, %s196, 128, 128, 8
        $region28: #{tpu_custom_call.1} parent=15 // pred_fallthru
          _
      $region16: #{tpu_custom_call.1} parent=5 // pred_fallthru
        _
      %p213 = scmp.le.s32.totalorder 1, %s18
      %p214 = scmp.lt.s32.totalorder %s18, 5
      %p215 = pnand %p213, %p214
      %p216 = pneg %p215
      // Predicated region
      $region29: #{tpu_custom_call.1} parent=5 // pred_check
        _
      $region30: #{tpu_custom_call.1} parent=5 // pred_check_branch
        %218 = sbr.rel (%p215) target = $region32
      $region31: #{tpu_custom_call.1} parent=5 // pred_region
        %s219 = ssub.s32 %s18, 1
        %s220 = sand.u32 %s43, 1
        %s221 = scalar_lea.sflag [#allocation4], %s220
        %s222 = sand.u32 %s43, 1
        %s223 = smul.addr %s222, 8
        %s224 = scalar_lea.vmem [#allocation3], %s223
        // Predicated region
        $region33: #{tpu_custom_call.1} parent=31 // pred_check
          %p225 = pneg %p56
        $region34: #{tpu_custom_call.1} parent=31 // pred_check_branch
          %227 = sbr.rel (%p225) target = $region36
        $region35: #{tpu_custom_call.1} parent=31 // pred_region
          %228 = dma.done %s221, 128
        $region36: #{tpu_custom_call.1} parent=31 // pred_fallthru
          _
        %s229 = sand.u32 %s23, 1
        %s230 = scalar_lea.sflag [#allocation7], %s229
        %s231 = sand.u32 %s69, 1
        %s232 = smul.addr %s231, 64
        %s233 = scalar_lea.vmem [#allocation6], %s232
        // Predicated region
        $region37: #{tpu_custom_call.1} parent=31 // pred_check
          %p234 = pneg %p82
        $region38: #{tpu_custom_call.1} parent=31 // pred_check_branch
          %236 = sbr.rel (%p234) target = $region40
        $region39: #{tpu_custom_call.1} parent=31 // pred_region
          %237 = dma.done %s230, 1024
        $region40: #{tpu_custom_call.1} parent=31 // pred_fallthru
          _
        %s238 = sand.u32 %s23, 1
        %s239 = scalar_lea.sflag [#allocation7], %s238
        %s240 = sand.u32 %s95, 1
        %s241 = smul.addr %s240, 128
        %s242 = scalar_lea.vmem [#allocation8], %s241
        // Predicated region
        $region41: #{tpu_custom_call.1} parent=31 // pred_check
          %p243 = pneg %p108
        $region42: #{tpu_custom_call.1} parent=31 // pred_check_branch
          %245 = sbr.rel (%p243) target = $region44
        $region43: #{tpu_custom_call.1} parent=31 // pred_region
          %246 = dma.done %s239, 2048
        $region44: #{tpu_custom_call.1} parent=31 // pred_fallthru
          _
        %s247 = sand.u32 %s43, 1
        %s248 = scalar_lea.sflag [#allocation4], %s247
        %s249 = sand.u32 %s43, 1
        %s250 = smul.addr %s249, 8
        %s251 = scalar_lea.vmem [#allocation3], %s250
        %p252 = pneg %p56
        %p253 = pneg %p53
        %s254 = sand.u32 %s23, 1
        %s255 = scalar_lea.sflag [#allocation7], %s254
        %s256 = sand.u32 %s69, 1
        %s257 = smul.addr %s256, 64
        %s258 = scalar_lea.vmem [#allocation6], %s257
        %p259 = pneg %p82
        %p260 = pneg %p79
        %s261 = sand.u32 %s23, 1
        %s262 = scalar_lea.sflag [#allocation7], %s261
        %s263 = sand.u32 %s95, 1
        %s264 = smul.addr %s263, 128
        %s265 = scalar_lea.vmem [#allocation8], %s264
        %p266 = pneg %p108
        %p267 = pneg %p105
        %p268 = pneg %p134
        %p269 = pneg %p131
        %s270 = sand.u32 %s121, 1
        %s271 = scalar_lea.sflag [#allocation5], %s270
        %s272 = sand.u32 %s121, 1
        %s273 = smul.addr %s272, 8
        %s274 = scalar_lea.vmem [#allocation9], %s273
        %s275 = smul.u32 2, %s28
        %s276 = smul.u32 16, %s28
        %p277 = scmp.eq.s32.totalorder %s28, 0
        // Predicated region
        $region45: #{tpu_custom_call.1} parent=31 // pred_check
          %p278 = pneg %p277
        $region46: #{tpu_custom_call.1} parent=31 // pred_check_branch
          %280 = sbr.rel (%p278) target = $region48
        $region47: #{tpu_custom_call.1} parent=31 // pred_region
          %vm281 = vcmask 261120
          %282 = vst.msk [vmem:[#allocation2] sm:$0xff] %vm281, 0.0
        $region48: #{tpu_custom_call.1} parent=31 // pred_fallthru
          _
        %v283 = vld [vmem:[%s224] sm:$0xff]
        %v284 = vld [vmem:[%s233] sm:$0xff]
        %v285 = vld [vmem:[%s233 + $0x8] sm:$0xff]
        %v286 = vld [vmem:[%s233 + $0x10] sm:$0xff]
        %v287 = vld [vmem:[%s233 + $0x18] sm:$0xff]
        %v288 = vld [vmem:[%s233 + $0x20] sm:$0xff]
        %v289 = vld [vmem:[%s233 + $0x28] sm:$0xff]
        %v290 = vld [vmem:[%s233 + $0x30] sm:$0xff]
        %v291 = vld [vmem:[%s233 + $0x38] sm:$0xff]
        %vm292 = vcmask 261120
        %v294 = vsel %vm292, %v283, 0
        %296 = vmatprep.subr.mxu0 %v285
        %297 = vmatpush1.msra.mxu0 %v284
        %298 = vmatprep.subr.mxu0 %v287
        %299 = vmatpush1.msra.mxu0 %v286
        %300 = vmatprep.subr.mxu0 %v289
        %301 = vmatpush1.msra.mxu0 %v288
        %302 = vmatprep.subr.mxu0 %v291
        %303 = vmatpush1.msra.mxu0 %v290
        %304 = vmatprep.subr.mxu0 0.0
        %305 = vmatpush1.msra.mxu0 0.0
        %306 = vmatprep.subr.mxu0 0.0
        %307 = vmatpush1.msra.mxu0 0.0
        %308 = vmatprep.subr.mxu0 0.0
        %309 = vmatpush1.msra.mxu0 0.0
        %310 = vmatprep.subr.mxu0 0.0
        %311 = vmatpush1.msra.mxu0 0.0
        %312 = vmatprep.subr.mxu0 0.0
        %313 = vmatpush1.msra.mxu0 0.0
        %314 = vmatprep.subr.mxu0 0.0
        %315 = vmatpush1.msra.mxu0 0.0
        %316 = vmatprep.subr.mxu0 0.0
        %317 = vmatpush1.msra.mxu0 0.0
        %318 = vmatprep.subr.mxu0 0.0
        %319 = vmatpush1.msra.mxu0 0.0
        %320 = vmatprep.subr.mxu0 0.0
        %321 = vmatpush1.msra.mxu0 0.0
        %322 = vmatprep.subr.mxu0 0.0
        %323 = vmatpush1.msra.mxu0 0.0
        %324 = vmatprep.subr.mxu0 0.0
        %325 = vmatpush1.msra.mxu0 0.0
        %326 = vmatprep.subr.mxu0 0.0
        %327 = vmatpush1.msra.mxu0 0.0
        %328 = vmatprep.subr.mxu0 0.0
        %329 = vmatpush1.msra.mxu0 0.0
        %330 = vmatprep.subr.mxu0 0.0
        %331 = vmatpush1.msra.mxu0 0.0
        %332 = vmatprep.subr.mxu0 0.0
        %333 = vmatpush1.msra.mxu0 0.0
        %334 = vmatprep.subr.mxu0 0.0
        %335 = vmatpush1.msra.mxu0 0.0
        %336 = vmatprep.subr.mxu0 0.0
        %337 = vmatpush1.msra.mxu0 0.0
        %338 = vmatprep.subr.mxu0 0.0
        %339 = vmatpush1.msra.mxu0 0.0
        %340 = vmatprep.subr.mxu0 0.0
        %341 = vmatpush1.msra.mxu0 0.0
        %342 = vmatprep.subr.mxu0 0.0
        %343 = vmatpush1.msra.mxu0 0.0
        %344 = vmatprep.subr.mxu0 0.0
        %345 = vmatpush1.msra.mxu0 0.0
        %346 = vmatprep.subr.mxu0 0.0
        %347 = vmatpush1.msra.mxu0 0.0
        %348 = vmatprep.subr.mxu0 0.0
        %349 = vmatpush1.msra.mxu0 0.0
        %350 = vmatprep.subr.mxu0 0.0
        %351 = vmatpush1.msra.mxu0 0.0
        %352 = vmatprep.subr.mxu0 0.0
        %353 = vmatpush1.msra.mxu0 0.0
        %354 = vmatprep.subr.mxu0 0.0
        %355 = vmatpush1.msra.mxu0 0.0
        %356 = vmatprep.subr.mxu0 0.0
        %357 = vmatpush1.msra.mxu0 0.0
        %358 = vmatprep.subr.mxu0 0.0
        %359 = vmatpush1.msra.mxu0 0.0
        %360 = vmatprep.mubr.f32.mxu0 0.0
        %361 = vmatmul.mubr.f32.gmra.mrb[0].mxu0 %v294
        %v362 = vpop.f32.mrb[0].mxu0
        %v363 = vadd.f32 0.0, %v362
        %v364 = vpop.f32.mrb[0].mxu0
        %v365 = vadd.f32 0.0, %v364
        %366 = vdwg.mxu0
        %v367 = vxor.u32 %v363, 2147483648
        %v368 = vmul.f32 %v367, 1.442695
        %v369 = vpow.pop %v368
        %v370 = vadd.f32 %v369, 1.0
        %v371 = vrcp.pop %v370
        %v372 = vmul.f32 1.0, %v371
        %v373 = vmul.f32 %v363, %v372
        %v374 = vmul.f32 %v373, %v365
        %v375 = vld [vmem:[#allocation2] sm:$0xff]
        %v376 = vld [vmem:[%s242] sm:$0xff]
        %v377 = vld [vmem:[%s242 + $0x8] sm:$0xff]
        %v378 = vld [vmem:[%s242 + $0x10] sm:$0xff]
        %v379 = vld [vmem:[%s242 + $0x18] sm:$0xff]
        %v380 = vld [vmem:[%s242 + $0x20] sm:$0xff]
        %v381 = vld [vmem:[%s242 + $0x28] sm:$0xff]
        %v382 = vld [vmem:[%s242 + $0x30] sm:$0xff]
        %v383 = vld [vmem:[%s242 + $0x38] sm:$0xff]
        %v384 = vld [vmem:[%s242 + $0x40] sm:$0xff]
        %v385 = vld [vmem:[%s242 + $0x48] sm:$0xff]
        %v386 = vld [vmem:[%s242 + $0x50] sm:$0xff]
        %v387 = vld [vmem:[%s242 + $0x58] sm:$0xff]
        %v388 = vld [vmem:[%s242 + $0x60] sm:$0xff]
        %v389 = vld [vmem:[%s242 + $0x68] sm:$0xff]
        %v390 = vld [vmem:[%s242 + $0x70] sm:$0xff]
        %v391 = vld [vmem:[%s242 + $0x78] sm:$0xff]
        %392 = vmatprep.subr.mxu0 0.0
        %393 = vmatpush1.msra.mxu0 %v376
        %394 = vmatprep.subr.mxu0 0.0
        %395 = vmatpush1.msra.mxu0 %v377
        %396 = vmatprep.subr.mxu0 0.0
        %397 = vmatpush1.msra.mxu0 %v378
        %398 = vmatprep.subr.mxu0 0.0
        %399 = vmatpush1.msra.mxu0 %v379
        %400 = vmatprep.subr.mxu0 0.0
        %401 = vmatpush1.msra.mxu0 %v380
        %402 = vmatprep.subr.mxu0 0.0
        %403 = vmatpush1.msra.mxu0 %v381
        %404 = vmatprep.subr.mxu0 0.0
        %405 = vmatpush1.msra.mxu0 %v382
        %406 = vmatprep.subr.mxu0 0.0
        %407 = vmatpush1.msra.mxu0 %v383
        %408 = vmatprep.subr.mxu0 0.0
        %409 = vmatpush1.msra.mxu0 %v384
        %410 = vmatprep.subr.mxu0 0.0
        %411 = vmatpush1.msra.mxu0 %v385
        %412 = vmatprep.subr.mxu0 0.0
        %413 = vmatpush1.msra.mxu0 %v386
        %414 = vmatprep.subr.mxu0 0.0
        %415 = vmatpush1.msra.mxu0 %v387
        %416 = vmatprep.subr.mxu0 0.0
        %417 = vmatpush1.msra.mxu0 %v388
        %418 = vmatprep.subr.mxu0 0.0
        %419 = vmatpush1.msra.mxu0 %v389
        %420 = vmatprep.subr.mxu0 0.0
        %421 = vmatpush1.msra.mxu0 %v390
        %422 = vmatprep.subr.mxu0 0.0
        %423 = vmatpush1.msra.mxu0 %v391
        %424 = vmatprep.subr.mxu0 0.0
        %425 = vmatpush1.msra.mxu0 0.0
        %426 = vmatprep.subr.mxu0 0.0
        %427 = vmatpush1.msra.mxu0 0.0
        %428 = vmatprep.subr.mxu0 0.0
        %429 = vmatpush1.msra.mxu0 0.0
        %430 = vmatprep.subr.mxu0 0.0
        %431 = vmatpush1.msra.mxu0 0.0
        %432 = vmatprep.subr.mxu0 0.0
        %433 = vmatpush1.msra.mxu0 0.0
        %434 = vmatprep.subr.mxu0 0.0
        %435 = vmatpush1.msra.mxu0 0.0
        %436 = vmatprep.subr.mxu0 0.0
        %437 = vmatpush1.msra.mxu0 0.0
        %438 = vmatprep.subr.mxu0 0.0
        %439 = vmatpush1.msra.mxu0 0.0
        %440 = vmatprep.subr.mxu0 0.0
        %441 = vmatpush1.msra.mxu0 0.0
        %442 = vmatprep.subr.mxu0 0.0
        %443 = vmatpush1.msra.mxu0 0.0
        %444 = vmatprep.subr.mxu0 0.0
        %445 = vmatpush1.msra.mxu0 0.0
        %446 = vmatprep.subr.mxu0 0.0
        %447 = vmatpush1.msra.mxu0 0.0
        %448 = vmatprep.subr.mxu0 0.0
        %449 = vmatpush1.msra.mxu0 0.0
        %450 = vmatprep.subr.mxu0 0.0
        %451 = vmatpush1.msra.mxu0 0.0
        %452 = vmatprep.subr.mxu0 0.0
        %453 = vmatpush1.msra.mxu0 0.0
        %454 = vmatprep.subr.mxu0 0.0
        %455 = vmatpush1.msra.mxu0 0.0
        %456 = vmatprep.mubr.f32.mxu0 0.0
        %457 = vmatmul.mubr.f32.gmra.mrb[0].mxu0 %v374
        %v458 = vpop.f32.mrb[0].mxu0
        %v459 = vadd.f32 0.0, %v458
        %v460 = vpop.f32.mrb[0].mxu0
        %461 = vdwg.mxu0
        %v462 = vadd.f32 %v375, %v459
        %463 = vst.msk [vmem:[#allocation2] sm:$0xff] %vm292, %v462
        %p464 = scmp.eq.s32.totalorder %s28, 1
        // Predicated region
        $region49: #{tpu_custom_call.1} parent=31 // pred_check
          %p465 = pneg %p464
        $region50: #{tpu_custom_call.1} parent=31 // pred_check_branch
          %467 = sbr.rel (%p465) target = $region52
        $region51: #{tpu_custom_call.1} parent=31 // pred_region
          %v468 = vld [vmem:[#allocation2] sm:$0xff]
          %469 = vst.msk [vmem:[%s274] sm:$0xff] %vm292, %v468
        $region52: #{tpu_custom_call.1} parent=31 // pred_fallthru
          _
        %s470 = sand.u32 %s121, 1
        %s471 = scalar_lea.sflag [#allocation5], %s470
        %s472 = sand.u32 %s121, 1
        %s473 = smul.addr %s472, 8
        %s474 = scalar_lea.vmem [#allocation9], %s473
        // Predicated region
        $region53: #{tpu_custom_call.1} parent=31 // pred_check
          %p475 = pneg %p131
        $region54: #{tpu_custom_call.1} parent=31 // pred_check_branch
          %477 = sbr.rel (%p475) target = $region56
        $region55: #{tpu_custom_call.1} parent=31 // pred_region
          %s479 = ssub.s32 128, 128
          %480 = vsyncadd %s471, %s479
          %s481 = smul.addr %s27, 128
          %s482 = scalar_lea.hbm %s3, %s481
          %s484 = sshll.u32 %s474, 4
          %s485 = int_to_ptr.vmem [resolvable:$true] %s484
          %487 = dma.vmem_to_hbm [thread:$0]  %s485, 128, %s482, %s471
        $region56: #{tpu_custom_call.1} parent=31 // pred_fallthru
          _
      $region32: #{tpu_custom_call.1} parent=5 // pred_fallthru
        _
      %p488 = scmp.le.s32.totalorder 2, %s18
      // Predicated region
      $region57: #{tpu_custom_call.1} parent=5 // pred_check
        %p489 = pneg %p488
      $region58: #{tpu_custom_call.1} parent=5 // pred_check_branch
        %491 = sbr.rel (%p489) target = $region60
      $region59: #{tpu_custom_call.1} parent=5 // pred_region
        %s492 = ssub.s32 %s18, 2
        // Predicated region
        $region61: #{tpu_custom_call.1} parent=59 // pred_check
          %p493 = pneg %p137
        $region62: #{tpu_custom_call.1} parent=59 // pred_check_branch
          %495 = sbr.rel (%p493) target = $region64
        $region63: #{tpu_custom_call.1} parent=59 // pred_region
          %s496 = sand.u32 %s122, 1
          %s497 = scalar_lea.sflag [#allocation5], %s496
          %s498 = sand.u32 %s122, 1
          %s499 = smul.addr %s498, 8
          %s500 = scalar_lea.vmem [#allocation9], %s499
          %501 = dma.done %s497, 128
        $region64: #{tpu_custom_call.1} parent=59 // pred_fallthru
          _
      $region60: #{tpu_custom_call.1} parent=5 // pred_fallthru
        _
    $region6: #{tpu_custom_call.1} parent=1 // loop_footer
      %s22 = sadd.s32 1, %s18
    $region7: #{tpu_custom_call.1} parent=1 // loop_footer_branch
      %17 = sbr.rel target = $region3
    $region8: #{tpu_custom_call.1} parent=1 // loop_exit
      _
    %502 = vsyncpa [#allocation4], 1
    %s503 = scalar_lea.sflag [#allocation4], 1
    %504 = vsyncpa %s503, 1
    %505 = vsyncpa [#allocation7], 1
    %s506 = scalar_lea.sflag [#allocation7], 1
    %507 = vsyncpa %s506, 1
    %508 = vsyncpa [#allocation5], 1
    %s509 = scalar_lea.sflag [#allocation5], 1
    %510 = vsyncpa %s509, 1

</llo_original>
